<compile_context>
chip_gen: v5e
topology: v5e:2x2
jax: 0.10.0
libtpu: 0.0.40
codegen_flags: <defaults>
</compile_context>

<pallas_src>
import jax
import jax.numpy as jnp
import numpy as np
from jax.experimental import pallas as pl
from jax.experimental.pallas import tpu as pltpu


def _rope_kernel(cos_ref, sin_ref, xq_ref, xk_ref, oq_ref, ok_ref):
    """One (seq_tile, D) tile of RoPE applied to both xq and xk (shared cos/sin)."""
    cos = cos_ref[...]          # (tile_s, D) f32
    sin = sin_ref[...]          # (tile_s, D) f32, per-parity sign already folded in
    d = cos.shape[-1]
    # parity[s, j] = j % 2  (0 = "real" slot, 1 = "imag" slot of each pair)
    parity = jax.lax.broadcasted_iota(jnp.int32, cos.shape, dimension=1) % 2
    is_real = parity == 0

    def rotate(x_ref, o_ref):
        x = x_ref[...].astype(jnp.float32)                      # (tile_s, D), f32 math like torch .float()
        # partner[2i] = x[2i+1], partner[2i+1] = x[2i].
        # XLU lane-rolls are ~free here (kernel is HBM-bound); no in-kernel
        # reshape/stack/concat copies.
        partner = jnp.where(is_real,
                            pltpu.roll(x, shift=d - 1, axis=1),  # brings x[j+1] to j
                            pltpu.roll(x, shift=1, axis=1))      # brings x[j-1] to j
        o_ref[...] = (x * cos + partner * sin).astype(o_ref.dtype)

    rotate(xq_ref, oq_ref)
    rotate(xk_ref, ok_ref)


def _pick_seq_tile(seq_len, d, x_itemsize, budget_bytes=20 * 1024 * 1024):
    """Largest seq tile whose double-buffered pipeline fits the VMEM budget.

    Per grid step (x2 for double buffering): xq/xk in + xq/xk out tiles in the
    input dtype, plus cos/sin tiles in f32.  Budget kept <= ~20 MiB so the
    same choice is safe on v7x (64 MiB VMEM) as well as v5e/v6e (128 MiB).
    """
    def per_step(ts):
        return 2 * ts * d * (4 * x_itemsize + 2 * 4)

    tile = 1024                       # 512/1024-row tiles saturate HBM BW; tiny tiles don't
    while tile > 8 and per_step(tile) > budget_bytes:
        tile //= 2
    tile = min(tile, seq_len)
    if seq_len >= 8:
        tile = max(8, (tile // 8) * 8)
    return max(tile, 1)


@jax.jit
def _rope_apply(xq, xk, cos_full, sin_signed):
    b, h, s, d = xq.shape
    bh = b * h
    xq3 = xq.reshape(bh, s, d)        # free: merges adjacent dims, no transpose
    xk3 = xk.reshape(bh, s, d)

    tile_s = _pick_seq_tile(s, d, xq.dtype.itemsize)
    # (b*h) is the innermost grid axis so the cos/sin tile index is unchanged
    # across it -> the frequency-table tile stays resident in VMEM (fetched
    # once per seq tile instead of B*H times).
    grid = (pl.cdiv(s, tile_s), bh)

    # Last block dim is the full head_dim D (lane-dense for the typical D=128),
    # second-to-last is the big seq tile (sublane dim).
    x_spec = pl.BlockSpec((None, tile_s, d), lambda si, bi: (bi, si, 0))
    tbl_spec = pl.BlockSpec((tile_s, d), lambda si, bi: (si, 0))

    oq, ok = pl.pallas_call(
        _rope_kernel,
        out_shape=(jax.ShapeDtypeStruct((bh, s, d), xq.dtype),
                   jax.ShapeDtypeStruct((bh, s, d), xk.dtype)),
        grid=grid,
        in_specs=[tbl_spec, tbl_spec, x_spec, x_spec],
        out_specs=(x_spec, x_spec),
        compiler_params=pltpu.CompilerParams(
            dimension_semantics=("parallel", "parallel"),   # shards across v7x's 2 TCs; no-op on v5e/v6e
            vmem_limit_bytes=32 * 1024 * 1024),
        # TODO(synk): consider input_output_aliases={2: 0, 3: 1} when callers can
        # donate xq/xk, to drop the output allocations.
    )(cos_full, sin_signed, xq3, xk3)

    return oq.reshape(b, h, s, d), ok.reshape(b, h, s, d)


class RotaryEmbedding:
    """JAX/Pallas port of the PyTorch RotaryEmbedding module (forward pass)."""

    def __init__(self, dim, max_seq_len, theta=10000.0):
        assert dim % 2 == 0
        self.dim = dim
        inv_freq = 1.0 / (theta ** (jnp.arange(0, dim, 2, dtype=jnp.float32) / dim))
        t = jnp.arange(max_seq_len, dtype=jnp.float32)
        freqs = jnp.outer(t, inv_freq)                     # (max_seq_len, dim//2)
        # f32 tables (matches the PyTorch .float() compute path), expanded to
        # full interleaved width so the kernel needs no gather/reshape.
        self.cos_full = jnp.repeat(jnp.cos(freqs), 2, axis=-1)            # (max_seq_len, dim)
        sign = jnp.tile(jnp.array([-1.0, 1.0], dtype=jnp.float32), dim // 2)
        self.sin_signed = jnp.repeat(jnp.sin(freqs), 2, axis=-1) * sign   # (max_seq_len, dim)

    def __call__(self, xq, xk, seq_len):
        assert xq.ndim == 4 and xk.ndim == 4 and xq.shape[-1] == self.dim
        assert xq.shape == xk.shape, "fused kernel assumes matching q/k shapes"
        # TODO(synk): GQA (fewer k heads) would need a second pallas_call or
        # head-folded blocks; module spec only needs broadcast over (S, D).
        assert xq.shape[2] == seq_len
        return _rope_apply(xq, xk,
                           self.cos_full[:seq_len], self.sin_signed[:seq_len])


def _rope_reference(xq, xk, freqs_cis):
    """Pure-JAX mirror of the PyTorch complex-multiply formulation."""
    def rot(x):
        xr = x.astype(jnp.float32).reshape(*x.shape[:-1], -1, 2)
        xc = jax.lax.complex(xr[..., 0], xr[..., 1])
        oc = xc * freqs_cis[None, None, :, :]
        out = jnp.stack([jnp.real(oc), jnp.imag(oc)], axis=-1).reshape(x.shape)
        return out.astype(x.dtype)
    return rot(xq), rot(xk)


if __name__ == "__main__":
    B, H, SEQ, DIM, MAX_SEQ = 2, 4, 16, 128, 32
    key = jax.random.PRNGKey(0)
    kq, kk = jax.random.split(key)
    xq = jax.random.normal(kq, (B, H, SEQ, DIM), dtype=jnp.float32)
    xk = jax.random.normal(kk, (B, H, SEQ, DIM), dtype=jnp.float32)

    rope = RotaryEmbedding(dim=DIM, max_seq_len=MAX_SEQ)
    q_out, k_out = rope(xq, xk, SEQ)
    jax.block_until_ready((q_out, k_out))

    # Correctness check against the PyTorch-equivalent reference.
    theta = 10000.0
    inv_freq = 1.0 / (theta ** (jnp.arange(0, DIM, 2, dtype=jnp.float32) / DIM))
    freqs = jnp.outer(jnp.arange(SEQ, dtype=jnp.float32), inv_freq)
    freqs_cis = jax.lax.complex(jnp.cos(freqs), jnp.sin(freqs))
    q_ref, k_ref = _rope_reference(xq, xk, freqs_cis)

    np.testing.assert_allclose(np.asarray(q_out), np.asarray(q_ref), rtol=1e-5, atol=1e-5)
    np.testing.assert_allclose(np.asarray(k_out), np.asarray(k_ref), rtol=1e-5, atol=1e-5)
    print("KERNEL_OK")
</pallas_src>

<mosaic_0001>
module attributes {stable_mosaic.version = 11 : i64} {
  func.func @_rope_kernel(%arg0: i32, %arg1: i32, %arg2: memref<16x128xf32, #tpu.memory_space<vmem>>, %arg3: memref<16x128xf32, #tpu.memory_space<vmem>>, %arg4: memref<1x16x128xf32, #tpu.memory_space<vmem>>, %arg5: memref<1x16x128xf32, #tpu.memory_space<vmem>>, %arg6: memref<1x16x128xf32, #tpu.memory_space<vmem>>, %arg7: memref<1x16x128xf32, #tpu.memory_space<vmem>>) attributes {dimension_semantics = [#tpu.dimension_semantics<parallel>, #tpu.dimension_semantics<parallel>], iteration_bounds = array<i64: 1, 8>, scalar_prefetch = 0 : i64, scratch_operands = 0 : i64, tpu.core_type = #tpu.core_type<tc>, window_params = [{transform_indices = @transform_0, window_bounds = array<i64: 16, 128>}, {transform_indices = @transform_1, window_bounds = array<i64: 16, 128>}, {transform_indices = @transform_2, window_bounds = array<i64: 1, 16, 128>}, {transform_indices = @transform_3, window_bounds = array<i64: 1, 16, 128>}, {transform_indices = @transform_4, window_bounds = array<i64: 1, 16, 128>}, {transform_indices = @transform_5, window_bounds = array<i64: 1, 16, 128>}]} {
    %c0 = arith.constant 0 : index
    %c0_0 = arith.constant 0 : index
    %0 = vector.load %arg2[%c0, %c0_0] : memref<16x128xf32, #tpu.memory_space<vmem>>, vector<16x128xf32>
    %c0_1 = arith.constant 0 : index
    %c0_2 = arith.constant 0 : index
    %1 = vector.load %arg3[%c0_1, %c0_2] : memref<16x128xf32, #tpu.memory_space<vmem>>, vector<16x128xf32>
    %2 = tpu.iota {dimensions = array<i32: 1>} : vector<16x128xi32>
    %c2_i32 = arith.constant 2 : i32
    %c0_i32 = arith.constant 0 : i32
    %3 = arith.cmpi eq, %c2_i32, %c0_i32 : i32
    %c1_i32 = arith.constant 1 : i32
    %4 = arith.select %3, %c1_i32, %c2_i32 : i32
    %5 = vector.broadcast %4 : i32 to vector<16x128xi32>
    %6 = arith.remsi %2, %5 : vector<16x128xi32>
    %c0_i32_3 = arith.constant 0 : i32
    %7 = vector.broadcast %c0_i32_3 : i32 to vector<16x128xi32>
    %8 = arith.cmpi ne, %6, %7 : vector<16x128xi32>
    %c0_i32_4 = arith.constant 0 : i32
    %9 = vector.broadcast %c0_i32_4 : i32 to vector<16x128xi32>
    %10 = arith.cmpi slt, %6, %9 : vector<16x128xi32>
    %c0_i32_5 = arith.constant 0 : i32
    %11 = arith.cmpi slt, %4, %c0_i32_5 : i32
    %12 = vector.broadcast %11 : i1 to vector<16x128xi1>
    %13 = vector.broadcast %12 : vector<16x128xi1> to vector<16x128xi1>
    %14 = arith.xori %10, %13 : vector<16x128xi1>
    %15 = arith.andi %14, %8 : vector<16x128xi1>
    %16 = vector.broadcast %4 : i32 to vector<16x128xi32>
    %17 = arith.addi %6, %16 : vector<16x128xi32>
    %18 = arith.select %15, %17, %6 : vector<16x128xi1>, vector<16x128xi32>
    %c0_i32_6 = arith.constant 0 : i32
    %19 = vector.broadcast %c0_i32_6 : i32 to vector<16x128xi32>
    %20 = arith.cmpi eq, %18, %19 : vector<16x128xi32>
    %c0_7 = arith.constant 0 : index
    %c0_8 = arith.constant 0 : index
    %c0_9 = arith.constant 0 : index
    %21 = vector.load %arg4[%c0_7, %c0_8, %c0_9] : memref<1x16x128xf32, #tpu.memory_space<vmem>>, vector<1x16x128xf32>
    %22 = vector.shape_cast %21 : vector<1x16x128xf32> to vector<16x128xf32>
    %c127_i32 = arith.constant 127 : i32
    %23 = tpu.dynamic_rotate %22 by %c127_i32 dim 1 : vector<16x128xf32>, i32 -> vector<16x128xf32>
    %c1_i32_10 = arith.constant 1 : i32
    %24 = tpu.dynamic_rotate %22 by %c1_i32_10 dim 1 : vector<16x128xf32>, i32 -> vector<16x128xf32>
    %25 = arith.select %20, %23, %24 : vector<16x128xi1>, vector<16x128xf32>
    %26 = arith.mulf %22, %0 : vector<16x128xf32>
    %27 = arith.mulf %25, %1 : vector<16x128xf32>
    %28 = arith.addf %26, %27 : vector<16x128xf32>
    %c0_11 = arith.constant 0 : index
    %c0_12 = arith.constant 0 : index
    %c0_13 = arith.constant 0 : index
    %29 = vector.load %arg6[%c0_11, %c0_12, %c0_13] : memref<1x16x128xf32, #tpu.memory_space<vmem>>, vector<1x16x128xf32>
    %30 = vector.shape_cast %29 : vector<1x16x128xf32> to vector<16x128xf32>
    %31 = vector.shape_cast %28 : vector<16x128xf32> to vector<1x16x128xf32>
    tpu.vector_store %arg6[%c0_11, %c0_12, %c0_13], %31 {strides = array<i32>} : memref<1x16x128xf32, #tpu.memory_space<vmem>>, vector<1x16x128xf32>,
    %c0_14 = arith.constant 0 : index
    %c0_15 = arith.constant 0 : index
    %c0_16 = arith.constant 0 : index
    %32 = vector.load %arg5[%c0_14, %c0_15, %c0_16] : memref<1x16x128xf32, #tpu.memory_space<vmem>>, vector<1x16x128xf32>
    %33 = vector.shape_cast %32 : vector<1x16x128xf32> to vector<16x128xf32>
    %c127_i32_17 = arith.constant 127 : i32
    %34 = tpu.dynamic_rotate %33 by %c127_i32_17 dim 1 : vector<16x128xf32>, i32 -> vector<16x128xf32>
    %c1_i32_18 = arith.constant 1 : i32
    %35 = tpu.dynamic_rotate %33 by %c1_i32_18 dim 1 : vector<16x128xf32>, i32 -> vector<16x128xf32>
    %36 = arith.select %20, %34, %35 : vector<16x128xi1>, vector<16x128xf32>
    %37 = arith.mulf %33, %0 : vector<16x128xf32>
    %38 = arith.mulf %36, %1 : vector<16x128xf32>
    %39 = arith.addf %37, %38 : vector<16x128xf32>
    %c0_19 = arith.constant 0 : index
    %c0_20 = arith.constant 0 : index
    %c0_21 = arith.constant 0 : index
    %40 = vector.load %arg7[%c0_19, %c0_20, %c0_21] : memref<1x16x128xf32, #tpu.memory_space<vmem>>, vector<1x16x128xf32>
    %41 = vector.shape_cast %40 : vector<1x16x128xf32> to vector<16x128xf32>
    %42 = vector.shape_cast %39 : vector<16x128xf32> to vector<1x16x128xf32>
    tpu.vector_store %arg7[%c0_19, %c0_20, %c0_21], %42 {strides = array<i32>} : memref<1x16x128xf32, #tpu.memory_space<vmem>>, vector<1x16x128xf32>,
    return
  }
  func.func @transform_0(%arg0: i32, %arg1: i32) -> (i32, i32) {
    %c0_i32 = arith.constant 0 : i32
    %c0_i32_0 = arith.constant 0 : i32
    return %arg0, %c0_i32 : i32, i32
  }
  func.func @transform_1(%arg0: i32, %arg1: i32) -> (i32, i32) {
    %c0_i32 = arith.constant 0 : i32
    %c0_i32_0 = arith.constant 0 : i32
    return %arg0, %c0_i32 : i32, i32
  }
  func.func @transform_2(%arg0: i32, %arg1: i32) -> (i32, i32, i32) {
    %c0_i32 = arith.constant 0 : i32
    %c0_i32_0 = arith.constant 0 : i32
    return %arg1, %arg0, %c0_i32 : i32, i32, i32
  }
  func.func @transform_3(%arg0: i32, %arg1: i32) -> (i32, i32, i32) {
    %c0_i32 = arith.constant 0 : i32
    %c0_i32_0 = arith.constant 0 : i32
    return %arg1, %arg0, %c0_i32 : i32, i32, i32
  }
  func.func @transform_4(%arg0: i32, %arg1: i32) -> (i32, i32, i32) {
    %c0_i32 = arith.constant 0 : i32
    %c0_i32_0 = arith.constant 0 : i32
    return %arg1, %arg0, %c0_i32 : i32, i32, i32
  }
  func.func @transform_5(%arg0: i32, %arg1: i32) -> (i32, i32, i32) {
    %c0_i32 = arith.constant 0 : i32
    %c0_i32_0 = arith.constant 0 : i32
    return %arg1, %arg0, %c0_i32 : i32, i32, i32
  }
}

</mosaic_0001>

<llo_original>
// kernel: _rope_apply.1
$region0: #{_rope_apply.1}
  #allocation0 [shape = 'u32[]', space=smem, size = 0x4, offset = 0x4, fixed_abs, tag = 'smem constant byte address 0x4 - core index']
  #allocation1 [shape = 'u32[72,128]{1,0:T(1,128)}', space=vmem, size = 0x9000, scoped, tag = 'internal scratch']
  %s0 = inlined_call_operand.hbm [shape: f32[16,128], index: 0, kind: input, shape index: {}]
  %s1 = inlined_call_operand.hbm [shape: f32[16,128], index: 1, kind: input, shape index: {}]
  %s2 = inlined_call_operand.hbm [shape: f32[8,16,128], index: 2, kind: input, shape index: {}]
  %s3 = inlined_call_operand.hbm [shape: f32[8,16,128], index: 3, kind: input, shape index: {}]
  %s4 = inlined_call_operand.hbm [shape: f32[8,16,128], index: 4, kind: output, shape index: {0}]
  %s5 = inlined_call_operand.hbm [shape: f32[8,16,128], index: 5, kind: output, shape index: {1}]
  %6 = xla_tuple %s4, %s5
  %s7 = sld [smem:[#allocation0]]
  $region73: #{_rope_apply.1} parent=0
    _
  %s9 = ssub.s32 1, %s7
  %s10 = scalar_select 0, %s9, %s7
  $region1: #{_rope_apply.1} parent=0
    #allocation2 [shape = 'u8[8192]{0}', space=vmem, size = 0x2000, scoped, tag = 'input window, operand 0, single buffered']
    #allocation3 [shape = 's32[2]{0}', space=sflag, size = 0x8, scoped, tag = 'scoped memory for _rope_apply.1']
    #allocation4 [shape = 's32[2]{0}', space=sflag, size = 0x8, scoped, tag = 'scoped memory for _rope_apply.1']
    #allocation5 [shape = 'u8[8192]{0}', space=vmem, size = 0x2000, scoped, tag = 'input window, operand 1, single buffered']
    #allocation6 [shape = 's32[1]{0}', space=sflag, size = 0x4, scoped, tag = 'scoped memory for _rope_apply.1']
    #allocation7 [shape = 'u8[16384]{0}', space=vmem, size = 0x4000, scoped, tag = 'input window, operand 2']
    #allocation8 [shape = 'u8[16384]{0}', space=vmem, size = 0x4000, scoped, tag = 'input window, operand 3']
    #allocation9 [shape = 'u8[16384]{0}', space=vmem, size = 0x4000, scoped, tag = 'output window, operand 0']
    #allocation10 [shape = 'u8[16384]{0}', space=vmem, size = 0x4000, scoped, tag = 'output window, operand 1']
    #allocation11 [shape = 's32[2]{0}', space=sflag, size = 0x8, scoped, tag = 'scoped memory for _rope_apply.1']
    %11 = vsyncpa [#allocation3], 0
    %12 = vsyncpa [#allocation6], 0
    %13 = vsyncpa [#allocation4], 0
    %s14 = scalar_lea.sflag [#allocation4], 1
    %15 = vsyncpa %s14, 0
    %16 = vsyncpa [#allocation11], 0
    %s17 = scalar_lea.sflag [#allocation11], 1
    %18 = vsyncpa %s17, 0
    loop: start=0, step=1, limit=10
    $region2: #{_rope_apply.1} parent=1 // loop_pre_header
      _
    $region3: #{_rope_apply.1} parent=1 // loop_header
      %s20 = sphi 0, %s24
      %p21 = scmp.ge.s32.totalorder %s20, 10
      %s27 = sphi 0, %s39
      %s28 = sphi 0, %s35
      %s29 = sphi 0, %s27
      %s30 = sphi 0, %s28
      %s31 = sphi 0, %s29
      %s32 = sphi 0, %s30
      %s42 = sphi 0, %s44
      %s45 = sphi 0, %s42
      %s46 = sphi 0, %s45
      %s62 = sphi 0, %s46
      %s68 = sphi 0, %s70
      %s71 = sphi 0, %s68
      %s72 = sphi 0, %s71
      %s88 = sphi 0, %s72
      %s96 = sphi 0, %s98
      %s99 = sphi 0, %s96
      %s100 = sphi 0, %s99
      %s116 = sphi 0, %s100
      %s124 = sphi 0, %s126
      %s127 = sphi 0, %s124
      %s128 = sphi 0, %s127
      %s144 = sphi 0, %s128
      %s152 = sphi 0, %s154
      %s155 = sphi 0, %s152
      %s156 = sphi 0, %s155
      %s172 = sphi 0, %s156
      %s180 = sphi 0, %s182
      %s183 = sphi 0, %s180
      %s184 = sphi 0, %s183
      %s200 = sphi 0, %s184
    $region4: #{_rope_apply.1} parent=1 // loop_header_branch
      %23 = sbr.rel (%p21) target = $region8
    $region5: #{_rope_apply.1} parent=1 // loop_body
      %s25 = ssub.s32 %s20, 1
      %s26 = ssub.s32 %s20, 2
      %s33 = sadd.s32 1, %s28
      %p34 = scmp.ge.s32.totalorder %s33, 8
      %s35 = scalar_select %p34, 0, %s33
      %s36 = sadd.s32 1, %s27
      %s37 = scalar_select %p34, %s36, %s27
      %p38 = scmp.ge.s32.totalorder %s37, 1
      %s39 = scalar_select %p38, 0, %s37
      %s40 = ssub.s32 %s27, %s39
      %p41 = scmp.eq.s32.totalorder %s40, 0
      %s43 = sadd.s32 %s42, 1
      %s44 = scalar_select %p41, %s42, %s43
      %p47 = pneg %p41
      %p48 = scmp.eq.s32.totalorder %s20, 7
      %p49 = por %p47, %p48
      %p50 = scmp.ne.s32.totalorder %s42, %s45
      %p51 = scmp.eq.s32.totalorder %s20, 0
      %p52 = por %p50, %p51
      %p53 = scmp.ne.s32.totalorder %s42, %s45
      %p54 = scmp.eq.s32.totalorder %s25, 7
      %p55 = por %p53, %p54
      %p56 = scmp.ne.s32.totalorder %s45, %s46
      %p57 = scmp.eq.s32.totalorder %s25, 0
      %p58 = por %p56, %p57
      %p59 = scmp.ne.s32.totalorder %s45, %s46
      %p60 = scmp.eq.s32.totalorder %s26, 7
      %p61 = por %p59, %p60
      %p63 = scmp.ne.s32.totalorder %s46, %s62
      %p64 = scmp.eq.s32.totalorder %s26, 0
      %p65 = por %p63, %p64
      %s66 = ssub.s32 %s27, %s39
      %p67 = scmp.eq.s32.totalorder %s66, 0
      %s69 = sadd.s32 %s68, 1
      %s70 = scalar_select %p67, %s68, %s69
      %p73 = pneg %p67
      %p74 = scmp.eq.s32.totalorder %s20, 7
      %p75 = por %p73, %p74
      %p76 = scmp.ne.s32.totalorder %s68, %s71
      %p77 = scmp.eq.s32.totalorder %s20, 0
      %p78 = por %p76, %p77
      %p79 = scmp.ne.s32.totalorder %s68, %s71
      %p80 = scmp.eq.s32.totalorder %s25, 7
      %p81 = por %p79, %p80
      %p82 = scmp.ne.s32.totalorder %s71, %s72
      %p83 = scmp.eq.s32.totalorder %s25, 0
      %p84 = por %p82, %p83
      %p85 = scmp.ne.s32.totalorder %s71, %s72
      %p86 = scmp.eq.s32.totalorder %s26, 7
      %p87 = por %p85, %p86
      %p89 = scmp.ne.s32.totalorder %s72, %s88
      %p90 = scmp.eq.s32.totalorder %s26, 0
      %p91 = por %p89, %p90
      %s92 = ssub.s32 %s28, %s35
      %s93 = ssub.s32 %s27, %s39
      %s94 = sor.u32 %s92, %s93
      %p95 = scmp.eq.s32.totalorder %s94, 0
      %s97 = sadd.s32 %s96, 1
      %s98 = scalar_select %p95, %s96, %s97
      %p101 = pneg %p95
      %p102 = scmp.eq.s32.totalorder %s20, 7
      %p103 = por %p101, %p102
      %p104 = scmp.ne.s32.totalorder %s96, %s99
      %p105 = scmp.eq.s32.totalorder %s20, 0
      %p106 = por %p104, %p105
      %p107 = scmp.ne.s32.totalorder %s96, %s99
      %p108 = scmp.eq.s32.totalorder %s25, 7
      %p109 = por %p107, %p108
      %p110 = scmp.ne.s32.totalorder %s99, %s100
      %p111 = scmp.eq.s32.totalorder %s25, 0
      %p112 = por %p110, %p111
      %p113 = scmp.ne.s32.totalorder %s99, %s100
      %p114 = scmp.eq.s32.totalorder %s26, 7
      %p115 = por %p113, %p114
      %p117 = scmp.ne.s32.totalorder %s100, %s116
      %p118 = scmp.eq.s32.totalorder %s26, 0
      %p119 = por %p117, %p118
      %s120 = ssub.s32 %s28, %s35
      %s121 = ssub.s32 %s27, %s39
      %s122 = sor.u32 %s120, %s121
      %p123 = scmp.eq.s32.totalorder %s122, 0
      %s125 = sadd.s32 %s124, 1
      %s126 = scalar_select %p123, %s124, %s125
      %p129 = pneg %p123
      %p130 = scmp.eq.s32.totalorder %s20, 7
      %p131 = por %p129, %p130
      %p132 = scmp.ne.s32.totalorder %s124, %s127
      %p133 = scmp.eq.s32.totalorder %s20, 0
      %p134 = por %p132, %p133
      %p135 = scmp.ne.s32.totalorder %s124, %s127
      %p136 = scmp.eq.s32.totalorder %s25, 7
      %p137 = por %p135, %p136
      %p138 = scmp.ne.s32.totalorder %s127, %s128
      %p139 = scmp.eq.s32.totalorder %s25, 0
      %p140 = por %p138, %p139
      %p141 = scmp.ne.s32.totalorder %s127, %s128
      %p142 = scmp.eq.s32.totalorder %s26, 7
      %p143 = por %p141, %p142
      %p145 = scmp.ne.s32.totalorder %s128, %s144
      %p146 = scmp.eq.s32.totalorder %s26, 0
      %p147 = por %p145, %p146
      %s148 = ssub.s32 %s28, %s35
      %s149 = ssub.s32 %s27, %s39
      %s150 = sor.u32 %s148, %s149
      %p151 = scmp.eq.s32.totalorder %s150, 0
      %s153 = sadd.s32 %s152, 1
      %s154 = scalar_select %p151, %s152, %s153
      %p157 = pneg %p151
      %p158 = scmp.eq.s32.totalorder %s20, 7
      %p159 = por %p157, %p158
      %p160 = scmp.ne.s32.totalorder %s152, %s155
      %p161 = scmp.eq.s32.totalorder %s20, 0
      %p162 = por %p160, %p161
      %p163 = scmp.ne.s32.totalorder %s152, %s155
      %p164 = scmp.eq.s32.totalorder %s25, 7
      %p165 = por %p163, %p164
      %p166 = scmp.ne.s32.totalorder %s155, %s156
      %p167 = scmp.eq.s32.totalorder %s25, 0
      %p168 = por %p166, %p167
      %p169 = scmp.ne.s32.totalorder %s155, %s156
      %p170 = scmp.eq.s32.totalorder %s26, 7
      %p171 = por %p169, %p170
      %p173 = scmp.ne.s32.totalorder %s156, %s172
      %p174 = scmp.eq.s32.totalorder %s26, 0
      %p175 = por %p173, %p174
      %s176 = ssub.s32 %s28, %s35
      %s177 = ssub.s32 %s27, %s39
      %s178 = sor.u32 %s176, %s177
      %p179 = scmp.eq.s32.totalorder %s178, 0
      %s181 = sadd.s32 %s180, 1
      %s182 = scalar_select %p179, %s180, %s181
      %p185 = pneg %p179
      %p186 = scmp.eq.s32.totalorder %s20, 7
      %p187 = por %p185, %p186
      %p188 = scmp.ne.s32.totalorder %s180, %s183
      %p189 = scmp.eq.s32.totalorder %s20, 0
      %p190 = por %p188, %p189
      %p191 = scmp.ne.s32.totalorder %s180, %s183
      %p192 = scmp.eq.s32.totalorder %s25, 7
      %p193 = por %p191, %p192
      %p194 = scmp.ne.s32.totalorder %s183, %s184
      %p195 = scmp.eq.s32.totalorder %s25, 0
      %p196 = por %p194, %p195
      %p197 = scmp.ne.s32.totalorder %s183, %s184
      %p198 = scmp.eq.s32.totalorder %s26, 7
      %p199 = por %p197, %p198
      %p201 = scmp.ne.s32.totalorder %s184, %s200
      %p202 = scmp.eq.s32.totalorder %s26, 0
      %p203 = por %p201, %p202
      %p204 = scmp.le.s32.totalorder 1, %s20
      %p205 = scmp.lt.s32.totalorder %s20, 9
      %p206 = pnand %p204, %p205
      %p207 = pneg %p206
      // Predicated region
      $region9: #{_rope_apply.1} parent=5 // pred_check
        _
      $region10: #{_rope_apply.1} parent=5 // pred_check_branch
        %209 = sbr.rel (%p206) target = $region12
      $region11: #{_rope_apply.1} parent=5 // pred_region
        %s210 = ssub.s32 %s20, 1
        // Predicated region
        $region13: #{_rope_apply.1} parent=11 // pred_check
          %p211 = pneg %p58
        $region14: #{_rope_apply.1} parent=11 // pred_check_branch
          %213 = sbr.rel (%p211) target = $region16
        $region15: #{_rope_apply.1} parent=11 // pred_region
          %s214 = smul.u32 2, %s29
          %216 = vsyncadd [#allocation3], 0
          %s217 = smul.addr %s214, 8
          %s218 = scalar_lea.hbm %s0, %s217
          %s219 = sshll.u32 %s218, 4
          %s220 = int_to_ptr.hbm [resolvable:$true] %s219
          %s221 = sshll.u32 [#allocation2], 4
          %s222 = int_to_ptr.vmem [resolvable:$true] %s221
          %227 = dma.hbm_to_vmem [thread:$0]  %s220, 256, %s222, [#allocation3], 128, 128, 8
        $region16: #{_rope_apply.1} parent=11 // pred_fallthru
          _
        // Predicated region
        $region17: #{_rope_apply.1} parent=11 // pred_check
          %p228 = pneg %p84
        $region18: #{_rope_apply.1} parent=11 // pred_check_branch
          %230 = sbr.rel (%p228) target = $region20
        $region19: #{_rope_apply.1} parent=11 // pred_region
          %s231 = smul.u32 2, %s29
          %233 = vsyncadd [#allocation6], 0
          %s234 = smul.addr %s231, 8
          %s235 = scalar_lea.hbm %s1, %s234
          %s236 = sshll.u32 %s235, 4
          %s237 = int_to_ptr.hbm [resolvable:$true] %s236
          %s238 = sshll.u32 [#allocation5], 4
          %s239 = int_to_ptr.vmem [resolvable:$true] %s238
          %244 = dma.hbm_to_vmem [thread:$0]  %s237, 256, %s239, [#allocation6], 128, 128, 8
        $region20: #{_rope_apply.1} parent=11 // pred_fallthru
          _
      $region12: #{_rope_apply.1} parent=5 // pred_fallthru
        _
      %p245 = scmp.lt.s32.totalorder %s20, 8
      // Predicated region
      $region21: #{_rope_apply.1} parent=5 // pred_check
        %p246 = pneg %p245
      $region22: #{_rope_apply.1} parent=5 // pred_check_branch
        %248 = sbr.rel (%p246) target = $region24
      $region23: #{_rope_apply.1} parent=5 // pred_region
        // Predicated region
        $region25: #{_rope_apply.1} parent=23 // pred_check
          %p249 = pneg %p106
        $region26: #{_rope_apply.1} parent=23 // pred_check_branch
          %251 = sbr.rel (%p249) target = $region28
        $region27: #{_rope_apply.1} parent=23 // pred_region
          %s252 = sand.u32 %s20, 1
          %s253 = scalar_lea.sflag [#allocation3], %s252
          %s254 = sand.u32 %s96, 1
          %s255 = smul.addr %s254, 16
          %s256 = scalar_lea.vmem [#allocation7], %s255
          %s257 = smul.u32 2, %s27
          %259 = vsyncadd %s253, 0
          %s260 = smul.addr %s28, 2
          %s261 = sadd.s32 %s257, %s260
          %s262 = smul.addr %s261, 8
          %s263 = scalar_lea.hbm %s2, %s262
          %s264 = sshll.u32 %s263, 4
          %s265 = int_to_ptr.hbm [resolvable:$true] %s264
          %s266 = sshll.u32 %s256, 4
          %s267 = int_to_ptr.vmem [resolvable:$true] %s266
          %272 = dma.hbm_to_vmem [thread:$0]  %s265, 256, %s267, %s253, 128, 128, 8
        $region28: #{_rope_apply.1} parent=23 // pred_fallthru
          _
        // Predicated region
        $region29: #{_rope_apply.1} parent=23 // pred_check
          %p273 = pneg %p134
        $region30: #{_rope_apply.1} parent=23 // pred_check_branch
          %275 = sbr.rel (%p273) target = $region32
        $region31: #{_rope_apply.1} parent=23 // pred_region
          %s276 = sand.u32 %s20, 1
          %s277 = scalar_lea.sflag [#allocation3], %s276
          %s278 = sand.u32 %s124, 1
          %s279 = smul.addr %s278, 16
          %s280 = scalar_lea.vmem [#allocation8], %s279
          %s281 = smul.u32 2, %s27
          %283 = vsyncadd %s277, 0
          %s284 = smul.addr %s28, 2
          %s285 = sadd.s32 %s281, %s284
          %s286 = smul.addr %s285, 8
          %s287 = scalar_lea.hbm %s3, %s286
          %s288 = sshll.u32 %s287, 4
          %s289 = int_to_ptr.hbm [resolvable:$true] %s288
          %s290 = sshll.u32 %s280, 4
          %s291 = int_to_ptr.vmem [resolvable:$true] %s290
          %296 = dma.hbm_to_vmem [thread:$0]  %s289, 256, %s291, %s277, 128, 128, 8
        $region32: #{_rope_apply.1} parent=23 // pred_fallthru
          _
      $region24: #{_rope_apply.1} parent=5 // pred_fallthru
        _
      %p297 = scmp.le.s32.totalorder 1, %s20
      %p298 = scmp.lt.s32.totalorder %s20, 9
      %p299 = pnand %p297, %p298
      %p300 = pneg %p299
      // Predicated region
      $region33: #{_rope_apply.1} parent=5 // pred_check
        _
      $region34: #{_rope_apply.1} parent=5 // pred_check_branch
        %302 = sbr.rel (%p299) target = $region36
      $region35: #{_rope_apply.1} parent=5 // pred_region
        %s303 = ssub.s32 %s20, 1
        // Predicated region
        $region37: #{_rope_apply.1} parent=35 // pred_check
          %p304 = pneg %p58
        $region38: #{_rope_apply.1} parent=35 // pred_check_branch
          %306 = sbr.rel (%p304) target = $region40
        $region39: #{_rope_apply.1} parent=35 // pred_region
          %308 = dma.done [#allocation3], 256
        $region40: #{_rope_apply.1} parent=35 // pred_fallthru
          _
        // Predicated region
        $region41: #{_rope_apply.1} parent=35 // pred_check
          %p309 = pneg %p84
        $region42: #{_rope_apply.1} parent=35 // pred_check_branch
          %311 = sbr.rel (%p309) target = $region44
        $region43: #{_rope_apply.1} parent=35 // pred_region
          %313 = dma.done [#allocation6], 256
        $region44: #{_rope_apply.1} parent=35 // pred_fallthru
          _
        %s314 = sand.u32 %s25, 1
        %s315 = scalar_lea.sflag [#allocation3], %s314
        %s316 = sand.u32 %s99, 1
        %s317 = smul.addr %s316, 16
        %s318 = scalar_lea.vmem [#allocation7], %s317
        // Predicated region
        $region45: #{_rope_apply.1} parent=35 // pred_check
          %p319 = pneg %p112
        $region46: #{_rope_apply.1} parent=35 // pred_check_branch
          %321 = sbr.rel (%p319) target = $region48
        $region47: #{_rope_apply.1} parent=35 // pred_region
          %323 = dma.done %s315, 256
        $region48: #{_rope_apply.1} parent=35 // pred_fallthru
          _
        %s324 = sand.u32 %s25, 1
        %s325 = scalar_lea.sflag [#allocation3], %s324
        %s326 = sand.u32 %s127, 1
        %s327 = smul.addr %s326, 16
        %s328 = scalar_lea.vmem [#allocation8], %s327
        // Predicated region
        $region49: #{_rope_apply.1} parent=35 // pred_check
          %p329 = pneg %p140
        $region50: #{_rope_apply.1} parent=35 // pred_check_branch
          %331 = sbr.rel (%p329) target = $region52
        $region51: #{_rope_apply.1} parent=35 // pred_region
          %333 = dma.done %s325, 256
        $region52: #{_rope_apply.1} parent=35 // pred_fallthru
          _
        %p334 = pneg %p58
        %p335 = pneg %p55
        %p336 = pneg %p84
        %p337 = pneg %p81
        %s338 = sand.u32 %s25, 1
        %s339 = scalar_lea.sflag [#allocation3], %s338
        %s340 = sand.u32 %s99, 1
        %s341 = smul.addr %s340, 16
        %s342 = scalar_lea.vmem [#allocation7], %s341
        %p343 = pneg %p112
        %p344 = pneg %p109
        %s345 = sand.u32 %s25, 1
        %s346 = scalar_lea.sflag [#allocation3], %s345
        %s347 = sand.u32 %s127, 1
        %s348 = smul.addr %s347, 16
        %s349 = scalar_lea.vmem [#allocation8], %s348
        %p350 = pneg %p140
        %p351 = pneg %p137
        %p352 = pneg %p168
        %p353 = pneg %p165
        %s354 = sand.u32 %s155, 1
        %s355 = scalar_lea.sflag [#allocation4], %s354
        %s356 = sand.u32 %s155, 1
        %s357 = smul.addr %s356, 16
        %s358 = scalar_lea.vmem [#allocation9], %s357
        %p359 = pneg %p196
        %p360 = pneg %p193
        %s361 = sand.u32 %s183, 1
        %s362 = scalar_lea.sflag [#allocation11], %s361
        %s363 = sand.u32 %s183, 1
        %s364 = smul.addr %s363, 16
        %s365 = scalar_lea.vmem [#allocation10], %s364
        %s366 = smul.u32 2, %s29
        %s367 = smul.u32 2, %s29
        %s368 = smul.u32 2, %s29
        %s369 = smul.u32 2, %s29
        %s370 = smul.u32 2, %s29
        %s371 = smul.u32 2, %s29
        %v372 = vld [vmem:[#allocation2] sm:$0xff]
        %v373 = vld [vmem:[#allocation2 + $0x8] sm:$0xff]
        %v374 = vld [vmem:[#allocation5] sm:$0xff]
        %v375 = vld [vmem:[#allocation5 + $0x8] sm:$0xff]
        %v376 = vlaneseq
        %v377 = vand.u32 %v376, 127
        %vm378 = vcmp.lt.s32.totalorder %v377, 0
        %v379 = vsub.s32 0, %v377
        %v380 = vsel %vm378, %v379, %v377
        %v381 = vshrl.u32 %v380, 1
        %v382 = vand.u32 %v380, 1
        %v383 = vsub.s32 0, %v382
        %v384 = vsel %vm378, %v383, %v382
        %vm385 = vcmp.ne.s32.totalorder %v384, 0
        %vm386 = vcmp.lt.s32.totalorder %v384, 0
        %vm387 = vmand %vm386, %vm385
        %v388 = vadd.s32 %v384, 2
        %v389 = vsel %vm387, %v388, %v384
        %vm390 = vcmp.eq.s32.totalorder %v389, 0
        %v391 = vld [vmem:[%s318] sm:$0xff]
        %v392 = vld [vmem:[%s318 + $0x8] sm:$0xff]
        %393 = vrot.lane.b32.xlu0 %v391, 127
        %v394 = vpop.permute.xlu0 %393
        %395 = vrot.lane.b32.xlu0 %v392, 127
        %v396 = vpop.permute.xlu0 %395
        %397 = vrot.lane.b32.xlu0 %v391, 1
        %v398 = vpop.permute.xlu0 %397
        %399 = vrot.lane.b32.xlu0 %v392, 1
        %v400 = vpop.permute.xlu0 %399
        %v401 = vsel %vm390, %v394, %v398
        %v402 = vsel %vm390, %v396, %v400
        %v403 = vmul.f32 %v391, %v372
        %v404 = vmul.f32 %v392, %v373
        %v405 = vmul.f32 %v401, %v374
        %v406 = vmul.f32 %v402, %v375
        %v407 = vadd.f32 %v403, %v405
        %v408 = vadd.f32 %v404, %v406
        %409 = vst [vmem:[%s358] sm:$0xff] %v407
        %410 = vst [vmem:[%s358 + $0x8] sm:$0xff] %v408
        %v411 = vld [vmem:[%s328] sm:$0xff]
        %v412 = vld [vmem:[%s328 + $0x8] sm:$0xff]
        %413 = vrot.lane.b32.xlu0 %v411, 127
        %v414 = vpop.permute.xlu0 %413
        %415 = vrot.lane.b32.xlu0 %v412, 127
        %v416 = vpop.permute.xlu0 %415
        %417 = vrot.lane.b32.xlu0 %v411, 1
        %v418 = vpop.permute.xlu0 %417
        %419 = vrot.lane.b32.xlu0 %v412, 1
        %v420 = vpop.permute.xlu0 %419
        %v421 = vsel %vm390, %v414, %v418
        %v422 = vsel %vm390, %v416, %v420
        %v423 = vmul.f32 %v411, %v372
        %v424 = vmul.f32 %v412, %v373
        %v425 = vmul.f32 %v421, %v374
        %v426 = vmul.f32 %v422, %v375
        %v427 = vadd.f32 %v423, %v425
        %v428 = vadd.f32 %v424, %v426
        %429 = vst [vmem:[%s365] sm:$0xff] %v427
        %430 = vst [vmem:[%s365 + $0x8] sm:$0xff] %v428
        %s431 = sand.u32 %s155, 1
        %s432 = scalar_lea.sflag [#allocation4], %s431
        %s433 = sand.u32 %s155, 1
        %s434 = smul.addr %s433, 16
        %s435 = scalar_lea.vmem [#allocation9], %s434
        %s436 = sand.u32 %s183, 1
        %s437 = scalar_lea.sflag [#allocation11], %s436
        %s438 = sand.u32 %s183, 1
        %s439 = smul.addr %s438, 16
        %s440 = scalar_lea.vmem [#allocation10], %s439
        // Predicated region
        $region53: #{_rope_apply.1} parent=35 // pred_check
          %p441 = pneg %p165
        $region54: #{_rope_apply.1} parent=35 // pred_check_branch
          %443 = sbr.rel (%p441) target = $region56
        $region55: #{_rope_apply.1} parent=35 // pred_region
          %s444 = smul.u32 2, %s29
          %446 = vsyncadd %s432, 0
          %s447 = smul.addr %s30, 2
          %s448 = sadd.s32 %s444, %s447
          %s449 = smul.addr %s448, 8
          %s450 = scalar_lea.hbm %s4, %s449
          %s451 = sshll.u32 %s435, 4
          %s452 = int_to_ptr.vmem [resolvable:$true] %s451
          %s453 = sshll.u32 %s450, 4
          %s454 = int_to_ptr.hbm [resolvable:$true] %s453
          %459 = dma.vmem_to_hbm [thread:$0]  %s452, 256, %s454, %s432, 128, 128, 8
        $region56: #{_rope_apply.1} parent=35 // pred_fallthru
          _
        // Predicated region
        $region57: #{_rope_apply.1} parent=35 // pred_check
          %p460 = pneg %p193
        $region58: #{_rope_apply.1} parent=35 // pred_check_branch
          %462 = sbr.rel (%p460) target = $region60
        $region59: #{_rope_apply.1} parent=35 // pred_region
          %s463 = smul.u32 2, %s29
          %465 = vsyncadd %s437, 0
          %s466 = smul.addr %s30, 2
          %s467 = sadd.s32 %s463, %s466
          %s468 = smul.addr %s467, 8
          %s469 = scalar_lea.hbm %s5, %s468
          %s470 = sshll.u32 %s440, 4
          %s471 = int_to_ptr.vmem [resolvable:$true] %s470
          %s472 = sshll.u32 %s469, 4
          %s473 = int_to_ptr.hbm [resolvable:$true] %s472
          %478 = dma.vmem_to_hbm [thread:$0]  %s471, 256, %s473, %s437, 128, 128, 8
        $region60: #{_rope_apply.1} parent=35 // pred_fallthru
          _
      $region36: #{_rope_apply.1} parent=5 // pred_fallthru
        _
      %p479 = scmp.le.s32.totalorder 2, %s20
      // Predicated region
      $region61: #{_rope_apply.1} parent=5 // pred_check
        %p480 = pneg %p479
      $region62: #{_rope_apply.1} parent=5 // pred_check_branch
        %482 = sbr.rel (%p480) target = $region64
      $region63: #{_rope_apply.1} parent=5 // pred_region
        %s483 = ssub.s32 %s20, 2
        // Predicated region
        $region65: #{_rope_apply.1} parent=63 // pred_check
          %p484 = pneg %p171
        $region66: #{_rope_apply.1} parent=63 // pred_check_branch
          %486 = sbr.rel (%p484) target = $region68
        $region67: #{_rope_apply.1} parent=63 // pred_region
          %s487 = sand.u32 %s156, 1
          %s488 = scalar_lea.sflag [#allocation4], %s487
          %s489 = sand.u32 %s156, 1
          %s490 = smul.addr %s489, 16
          %s491 = scalar_lea.vmem [#allocation9], %s490
          %493 = dma.done %s488, 256
        $region68: #{_rope_apply.1} parent=63 // pred_fallthru
          _
        // Predicated region
        $region69: #{_rope_apply.1} parent=63 // pred_check
          %p494 = pneg %p199
        $region70: #{_rope_apply.1} parent=63 // pred_check_branch
          %496 = sbr.rel (%p494) target = $region72
        $region71: #{_rope_apply.1} parent=63 // pred_region
          %s497 = sand.u32 %s184, 1
          %s498 = scalar_lea.sflag [#allocation11], %s497
          %s499 = sand.u32 %s184, 1
          %s500 = smul.addr %s499, 16
          %s501 = scalar_lea.vmem [#allocation10], %s500
          %503 = dma.done %s498, 256
        $region72: #{_rope_apply.1} parent=63 // pred_fallthru
          _
      $region64: #{_rope_apply.1} parent=5 // pred_fallthru
        _
    $region6: #{_rope_apply.1} parent=1 // loop_footer
      %s24 = sadd.s32 1, %s20
    $region7: #{_rope_apply.1} parent=1 // loop_footer_branch
      %19 = sbr.rel target = $region3
    $region8: #{_rope_apply.1} parent=1 // loop_exit
      _
    %504 = vsyncpa [#allocation3], 1
    %s505 = scalar_lea.sflag [#allocation3], 1
    %506 = vsyncpa %s505, 1
    %507 = vsyncpa [#allocation6], 1
    %508 = vsyncpa [#allocation4], 1
    %s509 = scalar_lea.sflag [#allocation4], 1
    %510 = vsyncpa %s509, 1
    %511 = vsyncpa [#allocation11], 1
    %s512 = scalar_lea.sflag [#allocation11], 1
    %513 = vsyncpa %s512, 1

</llo_original>
